<compile_context>
chip_gen: v5e
topology: v5e:2x2
jax: 0.10.0
libtpu: 0.0.40
codegen_flags: <defaults>
</compile_context>

<pallas_src>
import jax
import jax.numpy as jnp
from jax.experimental import pallas as pl
from jax.experimental.pallas import tpu as pltpu


_NEG_INIT = -1e30  # finite "-inf": keeps the online-softmax rescale NaN-free


def _cdiv(a: int, b: int) -> int:
    return (a + b - 1) // b


def _round_up(x: int, m: int) -> int:
    return _cdiv(x, m) * m


def _vmem_capacity_bytes() -> int:
    try:
        cap = int(getattr(pltpu.get_tpu_info(), "vmem_capacity_bytes", 0))
        if cap > 0:
            return cap
    except Exception:
        pass
    return 64 * 1024 * 1024  # conservative default = v7x per-TensorCore VMEM


def _pick_tiles(B: int, C: int, dtype) -> tuple[int, int]:
    itemsize = jnp.dtype(dtype).itemsize
    sublane = max(8, 32 // itemsize)          # 8 f32, 16 bf16

    vmem_cap = _vmem_capacity_bytes()
    # Per-grid-step working set: 2 inputs x 2 pipeline buffers in the storage
    # dtype plus ~8 full-tile f32 temporaries (casts, z1/z2, e1/e2, products).
    budget = min(vmem_cap // 2, 48 * 1024 * 1024)   # 32 MiB on v7x, 48 MiB else
    per_elem = 2 * 2 * itemsize + 8 * 4
    max_elems = max(budget // per_elem, sublane * 128)

    if C <= max_elems // sublane:
        # Full class row in one block: single-pass softmax, grid over batch only.
        tc = C
        tb = max(sublane, (max_elems // max(C, 1)) // sublane * sublane)
    else:
        # Vocab-scale C: split classes over an 'arbitrary' axis (online softmax).
        tb = max(sublane, min(_round_up(B, sublane), 256))
        tc = max(128, (max_elems // tb) // 128 * 128)
        if tc >= C:
            tc = C

    # Batch clamps: keep >= 2 batch tiles when the batch allows it (megacore
    # split on v7x), and never let a block hang past the batch unless it IS the
    # whole batch (a full-dim block has no (8,128) divisibility requirement).
    if B >= 2 * sublane:
        tb = min(tb, _round_up(_cdiv(B, 2), sublane))
    if tb >= B:
        tb = B
    return tb, tc


def _make_kl_kernel(B: int, C: int, tb: int, tc: int):
    mask_rows = (B % tb) != 0
    mask_cols = (C % tc) != 0

    def kernel(l1_ref, l2_ref, out_ref, m1_s, m2_s, s1_s, s2_s, a_s):
        bi = pl.program_id(0)       # batch tile ("parallel")
        ci = pl.program_id(1)       # class tile ("arbitrary", reduction axis)

        @pl.when(ci == 0)
        def _init():
            m1_s[...] = jnp.full(m1_s.shape, _NEG_INIT, jnp.float32)
            m2_s[...] = jnp.full(m2_s.shape, _NEG_INIT, jnp.float32)
            s1_s[...] = jnp.zeros(s1_s.shape, jnp.float32)
            s2_s[...] = jnp.zeros(s2_s.shape, jnp.float32)
            a_s[...] = jnp.zeros(a_s.shape, jnp.float32)

        # Cast after the DMA: HBM traffic stays in the storage dtype, math in f32.
        l1 = l1_ref[...].astype(jnp.float32)
        l2 = l2_ref[...].astype(jnp.float32)

        if mask_cols:
            # Ragged last class tile: out-of-range columns (undefined data) are
            # pushed to a large negative value so exp() kills their contribution.
            col = jax.lax.broadcasted_iota(jnp.int32, l1.shape, 1) + ci * tc
            cvalid = col < C
            l1 = jnp.where(cvalid, l1, jnp.float32(_NEG_INIT))
            l2 = jnp.where(cvalid, l2, jnp.float32(_NEG_INIT))

        m1_prev = m1_s[...]
        m2_prev = m2_s[...]
        m1_new = jnp.maximum(m1_prev, jnp.max(l1, axis=-1, keepdims=True))
        m2_new = jnp.maximum(m2_prev, jnp.max(l2, axis=-1, keepdims=True))

        # Exactly two full-tile transcendental passes (exp) per chunk.
        z1 = l1 - m1_new
        z2 = l2 - m2_new
        e1 = jnp.exp(z1)
        e2 = jnp.exp(z2)
        s1c = jnp.sum(e1, axis=-1, keepdims=True)                      # (tb, 1)
        s2c = jnp.sum(e2, axis=-1, keepdims=True)                      # (tb, 1)
        ac = jnp.sum(e2 * (z2 - z1), axis=-1, keepdims=True)           # (tb, 1)

        # Online rescale of the running accumulators to the new maxes.
        # (a_s update must use the OLD s2 accumulator.)
        d1 = m1_prev - m1_new
        d2 = m2_prev - m2_new
        a_s[...] = jnp.exp(d2) * (a_s[...] + (d2 - d1) * s2_s[...]) + ac
        s1_s[...] = jnp.exp(d1) * s1_s[...] + s1c
        s2_s[...] = jnp.exp(d2) * s2_s[...] + s2c
        m1_s[...] = m1_new
        m2_s[...] = m2_new

        @pl.when(ci == pl.num_programs(1) - 1)
        def _finalize():
            # KL row = A/s2 + log(s1/s2); one reciprocal + one log, on a column.
            r2 = pl.reciprocal(s2_s[...], approx=False)
            kl_row = a_s[...] * r2 + jnp.log(s1_s[...] * r2)
            if mask_rows:
                row = jax.lax.broadcasted_iota(jnp.int32, kl_row.shape, 0) + bi * tb
                kl_row = jnp.where(row < B, kl_row, jnp.float32(0.0))
            # Lane-dense (1, 8, 128) partial-sum block; wrapper reads [bi, 0, 0].
            out_ref[...] = jnp.full(out_ref.shape, jnp.sum(kl_row), jnp.float32)

    return kernel


def kl_div_loss(logits1: jax.Array, logits2: jax.Array, *,
                tb: int | None = None, tc: int | None = None) -> jax.Array:
    """Pallas equivalent of KLDivLoss.forward(logits1, logits2) -> f32 scalar."""
    assert logits1.shape == logits2.shape, (
        f"logits1: {logits1.shape}, logits2: {logits2.shape}"
    )
    batch = logits1.shape[0]                 # 'batchmean' divisor (first dim)
    C = logits1.shape[-1]
    if logits1.ndim != 2:                    # softmax over last dim, sum over rest
        logits1 = logits1.reshape(-1, C)
        logits2 = logits2.reshape(-1, C)
    B = logits1.shape[0]

    itemsize = jnp.dtype(logits1.dtype).itemsize
    sublane = max(8, 32 // itemsize)

    tb_auto, tc_auto = _pick_tiles(B, C, logits1.dtype)
    if tb is None:
        tb = tb_auto
    else:
        tb = min(_round_up(tb, sublane), _round_up(B, sublane))
        if tb >= B:
            tb = B
    if tc is None:
        tc = tc_auto
    else:
        tc = _round_up(tc, 128)
        if tc >= C:
            tc = C

    nbt = _cdiv(B, tb)
    nct = _cdiv(C, tc)

    vmem_cap = _vmem_capacity_bytes()
    vmem_limit = int(max(32 * 2**20, min(vmem_cap - 8 * 2**20, 100 * 2**20)))

    kernel = _make_kl_kernel(B, C, tb, tc)
    out = pl.pallas_call(
        kernel,
        out_shape=jax.ShapeDtypeStruct((nbt, 8, 128), jnp.float32),
        grid_spec=pltpu.PrefetchScalarGridSpec(
            num_scalar_prefetch=0,
            grid=(nbt, nct),
            in_specs=[
                pl.BlockSpec((tb, tc), lambda i, k: (i, k)),
                pl.BlockSpec((tb, tc), lambda i, k: (i, k)),
            ],
            out_specs=pl.BlockSpec((1, 8, 128), lambda i, k: (i, 0, 0)),
            scratch_shapes=[pltpu.VMEM((tb, 1), jnp.float32) for _ in range(5)],
        ),
        compiler_params=pltpu.CompilerParams(
            dimension_semantics=("parallel", "arbitrary"),
            vmem_limit_bytes=vmem_limit,
        ),
    )(logits1, logits2)

    # Tiny final reduction in the wrapper; divide by the TRUE first-dim size.
    partials = out[:, 0, 0]
    return jnp.sum(partials) / jnp.float32(batch)


def _reference(logits1, logits2):
    # Pure-JAX reference (same math as the PyTorch module).
    C = logits1.shape[-1]
    l1 = logits1.astype(jnp.float32).reshape(-1, C)
    l2 = logits2.astype(jnp.float32).reshape(-1, C)
    p1 = jax.nn.softmax(l1, axis=-1)
    p2 = jax.nn.softmax(l2, axis=-1)
    kl = p2 * (jnp.log(p2) - jnp.log(p1))
    return jnp.sum(kl) / jnp.float32(logits1.shape[0])


if __name__ == "__main__":
    key = jax.random.PRNGKey(0)
    k1, k2, k3, k4, k5, k6 = jax.random.split(key, 6)

    # 1) MIL-style bag of logits: 8 instances, 32 classes (single-tile fast path).
    B, C = 8, 32
    l1 = jax.random.normal(k1, (B, C), dtype=jnp.float32)
    l2 = jax.random.normal(k2, (B, C), dtype=jnp.float32)
    loss = kl_div_loss(l1, l2)
    jax.block_until_ready(loss)
    ref = _reference(l1, l2)
    assert jnp.allclose(loss, ref, atol=1e-4, rtol=1e-4), (loss, ref)

    # 2) Ragged batch + ragged class split: exercises the online-softmax C axis,
    #    the in-kernel row/column masking, and multiple "parallel" batch tiles.
    B2, C2 = 20, 200
    l1b = jax.random.normal(k3, (B2, C2), dtype=jnp.float32)
    l2b = jax.random.normal(k4, (B2, C2), dtype=jnp.float32)
    loss2 = kl_div_loss(l1b, l2b, tb=8, tc=128)
    jax.block_until_ready(loss2)
    ref2 = _reference(l1b, l2b)
    assert jnp.allclose(loss2, ref2, atol=1e-4, rtol=1e-4), (loss2, ref2)

    # 3) Auto-tiled medium case (>= 2 batch tiles so megacore split is active).
    B3, C3 = 64, 256
    l1c = jax.random.normal(k5, (B3, C3), dtype=jnp.float32)
    l2c = jax.random.normal(k6, (B3, C3), dtype=jnp.float32)
    loss3 = kl_div_loss(l1c, l2c)
    jax.block_until_ready(loss3)
    ref3 = _reference(l1c, l2c)
    assert jnp.allclose(loss3, ref3, atol=1e-4, rtol=1e-4), (loss3, ref3)

    print("KERNEL_OK")
</pallas_src>

<mosaic_0001>
module attributes {stable_mosaic.version = 11 : i64} {
  func.func @kernel(%arg0: i32, %arg1: i32, %arg2: memref<8x32xf32, #tpu.memory_space<vmem>>, %arg3: memref<8x32xf32, #tpu.memory_space<vmem>>, %arg4: memref<1x8x128xf32, #tpu.memory_space<vmem>>, %arg5: memref<8x1xf32, #tpu.memory_space<vmem>>, %arg6: memref<8x1xf32, #tpu.memory_space<vmem>>, %arg7: memref<8x1xf32, #tpu.memory_space<vmem>>, %arg8: memref<8x1xf32, #tpu.memory_space<vmem>>, %arg9: memref<8x1xf32, #tpu.memory_space<vmem>>) attributes {dimension_semantics = [#tpu.dimension_semantics<parallel>, #tpu.dimension_semantics<arbitrary>], iteration_bounds = array<i64: 1, 1>, scalar_prefetch = 0 : i64, scratch_operands = 5 : i64, tpu.core_type = #tpu.core_type<tc>, window_params = [{transform_indices = @transform_0, window_bounds = array<i64: 8, 32>}, {transform_indices = @transform_1, window_bounds = array<i64: 8, 32>}, {transform_indices = @transform_2, window_bounds = array<i64: 1, 8, 128>}]} {
    %c0_i32 = arith.constant 0 : i32
    %0 = arith.cmpi eq, %arg1, %c0_i32 : i32
    %1 = arith.extui %0 : i1 to i32
    %c0_i32_0 = arith.constant 0 : i32
    %2 = arith.cmpi ne, %1, %c0_i32_0 : i32
    scf.if %2 {
      %cst_32 = arith.constant -1.000000e+30 : f32
      %53 = vector.broadcast %cst_32 : f32 to vector<8x1xf32>
      %c0_33 = arith.constant 0 : index
      %c0_34 = arith.constant 0 : index
      %54 = vector.load %arg5[%c0_33, %c0_34] : memref<8x1xf32, #tpu.memory_space<vmem>>, vector<8x1xf32>
      tpu.vector_store %arg5[%c0_33, %c0_34], %53 {strides = array<i32>} : memref<8x1xf32, #tpu.memory_space<vmem>>, vector<8x1xf32>,
      %cst_35 = arith.constant -1.000000e+30 : f32
      %55 = vector.broadcast %cst_35 : f32 to vector<8x1xf32>
      %c0_36 = arith.constant 0 : index
      %c0_37 = arith.constant 0 : index
      %56 = vector.load %arg6[%c0_36, %c0_37] : memref<8x1xf32, #tpu.memory_space<vmem>>, vector<8x1xf32>
      tpu.vector_store %arg6[%c0_36, %c0_37], %55 {strides = array<i32>} : memref<8x1xf32, #tpu.memory_space<vmem>>, vector<8x1xf32>,
      %cst_38 = arith.constant 0.000000e+00 : f32
      %57 = vector.broadcast %cst_38 : f32 to vector<8x1xf32>
      %c0_39 = arith.constant 0 : index
      %c0_40 = arith.constant 0 : index
      %58 = vector.load %arg7[%c0_39, %c0_40] : memref<8x1xf32, #tpu.memory_space<vmem>>, vector<8x1xf32>
      tpu.vector_store %arg7[%c0_39, %c0_40], %57 {strides = array<i32>} : memref<8x1xf32, #tpu.memory_space<vmem>>, vector<8x1xf32>,
      %cst_41 = arith.constant 0.000000e+00 : f32
      %59 = vector.broadcast %cst_41 : f32 to vector<8x1xf32>
      %c0_42 = arith.constant 0 : index
      %c0_43 = arith.constant 0 : index
      %60 = vector.load %arg8[%c0_42, %c0_43] : memref<8x1xf32, #tpu.memory_space<vmem>>, vector<8x1xf32>
      tpu.vector_store %arg8[%c0_42, %c0_43], %59 {strides = array<i32>} : memref<8x1xf32, #tpu.memory_space<vmem>>, vector<8x1xf32>,
      %cst_44 = arith.constant 0.000000e+00 : f32
      %61 = vector.broadcast %cst_44 : f32 to vector<8x1xf32>
      %c0_45 = arith.constant 0 : index
      %c0_46 = arith.constant 0 : index
      %62 = vector.load %arg9[%c0_45, %c0_46] : memref<8x1xf32, #tpu.memory_space<vmem>>, vector<8x1xf32>
      tpu.vector_store %arg9[%c0_45, %c0_46], %61 {strides = array<i32>} : memref<8x1xf32, #tpu.memory_space<vmem>>, vector<8x1xf32>,
    } else {
    }
    %c0 = arith.constant 0 : index
    %c0_1 = arith.constant 0 : index
    %3 = vector.load %arg2[%c0, %c0_1] : memref<8x32xf32, #tpu.memory_space<vmem>>, vector<8x32xf32>
    %c0_2 = arith.constant 0 : index
    %c0_3 = arith.constant 0 : index
    %4 = vector.load %arg3[%c0_2, %c0_3] : memref<8x32xf32, #tpu.memory_space<vmem>>, vector<8x32xf32>
    %c0_4 = arith.constant 0 : index
    %c0_5 = arith.constant 0 : index
    %5 = vector.load %arg5[%c0_4, %c0_5] : memref<8x1xf32, #tpu.memory_space<vmem>>, vector<8x1xf32>
    %c0_6 = arith.constant 0 : index
    %c0_7 = arith.constant 0 : index
    %6 = vector.load %arg6[%c0_6, %c0_7] : memref<8x1xf32, #tpu.memory_space<vmem>>, vector<8x1xf32>
    %cst = arith.constant dense<0xFF800000> : vector<8xf32>
    %7 = vector.multi_reduction <maximumf>, %3, %cst [1] : vector<8x32xf32> to vector<8xf32>
    %8 = vector.shape_cast %7 : vector<8xf32> to vector<8x1xf32>
    %9 = arith.maximumf %5, %8 : vector<8x1xf32>
    %cst_8 = arith.constant dense<0xFF800000> : vector<8xf32>
    %10 = vector.multi_reduction <maximumf>, %4, %cst_8 [1] : vector<8x32xf32> to vector<8xf32>
    %11 = vector.shape_cast %10 : vector<8xf32> to vector<8x1xf32>
    %12 = arith.maximumf %6, %11 : vector<8x1xf32>
    %13 = vector.broadcast %9 : vector<8x1xf32> to vector<8x32xf32>
    %14 = arith.subf %3, %13 : vector<8x32xf32>
    %15 = vector.broadcast %12 : vector<8x1xf32> to vector<8x32xf32>
    %16 = arith.subf %4, %15 : vector<8x32xf32>
    %17 = math.exp %14 : vector<8x32xf32>
    %18 = math.exp %16 : vector<8x32xf32>
    %cst_9 = arith.constant dense<0.000000e+00> : vector<8xf32>
    %19 = vector.multi_reduction <add>, %17, %cst_9 [1] : vector<8x32xf32> to vector<8xf32>
    %20 = vector.shape_cast %19 : vector<8xf32> to vector<8x1xf32>
    %cst_10 = arith.constant dense<0.000000e+00> : vector<8xf32>
    %21 = vector.multi_reduction <add>, %18, %cst_10 [1] : vector<8x32xf32> to vector<8xf32>
    %22 = vector.shape_cast %21 : vector<8xf32> to vector<8x1xf32>
    %23 = arith.subf %16, %14 : vector<8x32xf32>
    %24 = arith.mulf %18, %23 : vector<8x32xf32>
    %cst_11 = arith.constant dense<0.000000e+00> : vector<8xf32>
    %25 = vector.multi_reduction <add>, %24, %cst_11 [1] : vector<8x32xf32> to vector<8xf32>
    %26 = vector.shape_cast %25 : vector<8xf32> to vector<8x1xf32>
    %27 = arith.subf %5, %9 : vector<8x1xf32>
    %28 = arith.subf %6, %12 : vector<8x1xf32>
    %29 = math.exp %28 : vector<8x1xf32>
    %c0_12 = arith.constant 0 : index
    %c0_13 = arith.constant 0 : index
    %30 = vector.load %arg9[%c0_12, %c0_13] : memref<8x1xf32, #tpu.memory_space<vmem>>, vector<8x1xf32>
    %31 = arith.subf %28, %27 : vector<8x1xf32>
    %c0_14 = arith.constant 0 : index
    %c0_15 = arith.constant 0 : index
    %32 = vector.load %arg8[%c0_14, %c0_15] : memref<8x1xf32, #tpu.memory_space<vmem>>, vector<8x1xf32>
    %33 = arith.mulf %31, %32 : vector<8x1xf32>
    %34 = arith.addf %30, %33 : vector<8x1xf32>
    %35 = arith.mulf %29, %34 : vector<8x1xf32>
    %36 = arith.addf %35, %26 : vector<8x1xf32>
    %c0_16 = arith.constant 0 : index
    %c0_17 = arith.constant 0 : index
    %37 = vector.load %arg9[%c0_16, %c0_17] : memref<8x1xf32, #tpu.memory_space<vmem>>, vector<8x1xf32>
    tpu.vector_store %arg9[%c0_16, %c0_17], %36 {strides = array<i32>} : memref<8x1xf32, #tpu.memory_space<vmem>>, vector<8x1xf32>,
    %38 = math.exp %27 : vector<8x1xf32>
    %c0_18 = arith.constant 0 : index
    %c0_19 = arith.constant 0 : index
    %39 = vector.load %arg7[%c0_18, %c0_19] : memref<8x1xf32, #tpu.memory_space<vmem>>, vector<8x1xf32>
    %40 = arith.mulf %38, %39 : vector<8x1xf32>
    %41 = arith.addf %40, %20 : vector<8x1xf32>
    %c0_20 = arith.constant 0 : index
    %c0_21 = arith.constant 0 : index
    %42 = vector.load %arg7[%c0_20, %c0_21] : memref<8x1xf32, #tpu.memory_space<vmem>>, vector<8x1xf32>
    tpu.vector_store %arg7[%c0_20, %c0_21], %41 {strides = array<i32>} : memref<8x1xf32, #tpu.memory_space<vmem>>, vector<8x1xf32>,
    %43 = math.exp %28 : vector<8x1xf32>
    %c0_22 = arith.constant 0 : index
    %c0_23 = arith.constant 0 : index
    %44 = vector.load %arg8[%c0_22, %c0_23] : memref<8x1xf32, #tpu.memory_space<vmem>>, vector<8x1xf32>
    %45 = arith.mulf %43, %44 : vector<8x1xf32>
    %46 = arith.addf %45, %22 : vector<8x1xf32>
    %c0_24 = arith.constant 0 : index
    %c0_25 = arith.constant 0 : index
    %47 = vector.load %arg8[%c0_24, %c0_25] : memref<8x1xf32, #tpu.memory_space<vmem>>, vector<8x1xf32>
    tpu.vector_store %arg8[%c0_24, %c0_25], %46 {strides = array<i32>} : memref<8x1xf32, #tpu.memory_space<vmem>>, vector<8x1xf32>,
    %c0_26 = arith.constant 0 : index
    %c0_27 = arith.constant 0 : index
    %48 = vector.load %arg5[%c0_26, %c0_27] : memref<8x1xf32, #tpu.memory_space<vmem>>, vector<8x1xf32>
    tpu.vector_store %arg5[%c0_26, %c0_27], %9 {strides = array<i32>} : memref<8x1xf32, #tpu.memory_space<vmem>>, vector<8x1xf32>,
    %c0_28 = arith.constant 0 : index
    %c0_29 = arith.constant 0 : index
    %49 = vector.load %arg6[%c0_28, %c0_29] : memref<8x1xf32, #tpu.memory_space<vmem>>, vector<8x1xf32>
    tpu.vector_store %arg6[%c0_28, %c0_29], %12 {strides = array<i32>} : memref<8x1xf32, #tpu.memory_space<vmem>>, vector<8x1xf32>,
    %c0_i32_30 = arith.constant 0 : i32
    %50 = arith.cmpi eq, %arg1, %c0_i32_30 : i32
    %51 = arith.extui %50 : i1 to i32
    %c0_i32_31 = arith.constant 0 : i32
    %52 = arith.cmpi ne, %51, %c0_i32_31 : i32
    scf.if %52 {
      %c0_32 = arith.constant 0 : index
      %c0_33 = arith.constant 0 : index
      %53 = vector.load %arg8[%c0_32, %c0_33] : memref<8x1xf32, #tpu.memory_space<vmem>>, vector<8x1xf32>
      %54 = tpu.reciprocal %53 : vector<8x1xf32> -> vector<8x1xf32>
      %c0_34 = arith.constant 0 : index
      %c0_35 = arith.constant 0 : index
      %55 = vector.load %arg9[%c0_34, %c0_35] : memref<8x1xf32, #tpu.memory_space<vmem>>, vector<8x1xf32>
      %56 = arith.mulf %55, %54 : vector<8x1xf32>
      %c0_36 = arith.constant 0 : index
      %c0_37 = arith.constant 0 : index
      %57 = vector.load %arg7[%c0_36, %c0_37] : memref<8x1xf32, #tpu.memory_space<vmem>>, vector<8x1xf32>
      %58 = arith.mulf %57, %54 : vector<8x1xf32>
      %59 = math.log %58 : vector<8x1xf32>
      %60 = arith.addf %56, %59 : vector<8x1xf32>
      %61 = vector.shape_cast %60 : vector<8x1xf32> to vector<1x8x1xf32>
      %cst_38 = arith.constant dense<0.000000e+00> : vector<1xf32>
      %62 = vector.multi_reduction <add>, %61, %cst_38 [1, 2] : vector<1x8x1xf32> to vector<1xf32>
      %63 = vector.shape_cast %62 : vector<1xf32> to vector<1x1x1xf32>
      %64 = vector.extract %63[0, 0, 0] : f32 from vector<1x1x1xf32>
      %65 = vector.broadcast %64 : f32 to vector<1x8x128xf32>
      %c0_39 = arith.constant 0 : index
      %c0_40 = arith.constant 0 : index
      %c0_41 = arith.constant 0 : index
      %66 = vector.load %arg4[%c0_39, %c0_40, %c0_41] : memref<1x8x128xf32, #tpu.memory_space<vmem>>, vector<1x8x128xf32>
      tpu.vector_store %arg4[%c0_39, %c0_40, %c0_41], %65 {strides = array<i32>} : memref<1x8x128xf32, #tpu.memory_space<vmem>>, vector<1x8x128xf32>,
    } else {
    }
    return
  }
  func.func @transform_0(%arg0: i32, %arg1: i32) -> (i32, i32) {
    %c0_i32 = arith.constant 0 : i32
    return %arg0, %arg1 : i32, i32
  }
  func.func @transform_1(%arg0: i32, %arg1: i32) -> (i32, i32) {
    %c0_i32 = arith.constant 0 : i32
    return %arg0, %arg1 : i32, i32
  }
  func.func @transform_2(%arg0: i32, %arg1: i32) -> (i32, i32, i32) {
    %c0_i32 = arith.constant 0 : i32
    %c0_i32_0 = arith.constant 0 : i32
    %c0_i32_1 = arith.constant 0 : i32
    return %arg0, %c0_i32, %c0_i32_0 : i32, i32, i32
  }
}

</mosaic_0001>

<llo_original>
// kernel: tpu_custom_call.1
$region0: #{tpu_custom_call.1}
  #allocation0 [shape = 'u32[]', space=smem, size = 0x4, offset = 0x4, fixed_abs, tag = 'smem constant byte address 0x4 - core index']
  #allocation1 [shape = 'u32[72,128]{1,0:T(1,128)}', space=vmem, size = 0x9000, scoped, tag = 'internal scratch']
  #allocation2 [shape = 'f32[8,1]{1,0:T(8,128)}', space=vmem, size = 0x1000, scoped, tag = 'scratch operand']
  #allocation3 [shape = 'f32[8,1]{1,0:T(8,128)}', space=vmem, size = 0x1000, scoped, tag = 'scratch operand']
  #allocation4 [shape = 'f32[8,1]{1,0:T(8,128)}', space=vmem, size = 0x1000, scoped, tag = 'scratch operand']
  #allocation5 [shape = 'f32[8,1]{1,0:T(8,128)}', space=vmem, size = 0x1000, scoped, tag = 'scratch operand']
  #allocation6 [shape = 'f32[8,1]{1,0:T(8,128)}', space=vmem, size = 0x1000, scoped, tag = 'scratch operand']
  %s0 = inlined_call_operand.hbm [shape: f32[8,32], index: 0, kind: input, shape index: {}]
  %s1 = inlined_call_operand.hbm [shape: f32[8,32], index: 1, kind: input, shape index: {}]
  %s2 = inlined_call_operand.hbm [shape: f32[1,8,128], index: 2, kind: output, shape index: {}]
  %s3 = sld [smem:[#allocation0]]
  $region34: #{tpu_custom_call.1} parent=0
    _
  %s5 = ssub.s32 1, %s3
  %s6 = scalar_select 0, %s5, %s3
  $region1: #{tpu_custom_call.1} parent=0
    #allocation7 [shape = 'u8[4096]{0}', space=vmem, size = 0x1000, scoped, tag = 'input window, operand 0, single buffered']
    #allocation8 [shape = 's32[1]{0}', space=sflag, size = 0x4, scoped, tag = 'scoped memory for tpu_custom_call.1']
    #allocation9 [shape = 's32[1]{0}', space=sflag, size = 0x4, scoped, tag = 'scoped memory for tpu_custom_call.1']
    #allocation10 [shape = 'u8[4096]{0}', space=vmem, size = 0x1000, scoped, tag = 'input window, operand 1, single buffered']
    #allocation11 [shape = 's32[1]{0}', space=sflag, size = 0x4, scoped, tag = 'scoped memory for tpu_custom_call.1']
    #allocation12 [shape = 'u8[4096]{0}', space=vmem, size = 0x1000, scoped, tag = 'output window, operand 0, single buffered']
    %7 = vsyncpa [#allocation8], 0
    %8 = vsyncpa [#allocation11], 0
    %9 = vsyncpa [#allocation9], 0
    // Predicated region
    $region2: #{tpu_custom_call.1} parent=1 // pred_check
      _
    $region3: #{tpu_custom_call.1} parent=1 // pred_check_branch
      %11 = sbr.rel (0) target = $region5
    $region4: #{tpu_custom_call.1} parent=1 // pred_region
      %13 = vsyncadd [#allocation8], 0
      %s15 = sshll.u32 %s0, 4
      %s16 = int_to_ptr.hbm [resolvable:$true] %s15
      %s17 = sshll.u32 [#allocation7], 4
      %s18 = int_to_ptr.vmem [resolvable:$true] %s17
      %20 = dma.hbm_to_vmem [thread:$0]  %s16, 128, %s18, [#allocation8]
    $region5: #{tpu_custom_call.1} parent=1 // pred_fallthru
      _
    // Predicated region
    $region6: #{tpu_custom_call.1} parent=1 // pred_check
      _
    $region7: #{tpu_custom_call.1} parent=1 // pred_check_branch
      %22 = sbr.rel (0) target = $region9
    $region8: #{tpu_custom_call.1} parent=1 // pred_region
      %24 = vsyncadd [#allocation11], 0
      %s26 = sshll.u32 %s1, 4
      %s27 = int_to_ptr.hbm [resolvable:$true] %s26
      %s28 = sshll.u32 [#allocation10], 4
      %s29 = int_to_ptr.vmem [resolvable:$true] %s28
      %31 = dma.hbm_to_vmem [thread:$0]  %s27, 128, %s29, [#allocation11]
    $region9: #{tpu_custom_call.1} parent=1 // pred_fallthru
      _
    // Predicated region
    $region10: #{tpu_custom_call.1} parent=1 // pred_check
      _
    $region11: #{tpu_custom_call.1} parent=1 // pred_check_branch
      %33 = sbr.rel (0) target = $region13
    $region12: #{tpu_custom_call.1} parent=1 // pred_region
      %35 = dma.done [#allocation8], 128
    $region13: #{tpu_custom_call.1} parent=1 // pred_fallthru
      _
    // Predicated region
    $region14: #{tpu_custom_call.1} parent=1 // pred_check
      _
    $region15: #{tpu_custom_call.1} parent=1 // pred_check_branch
      %37 = sbr.rel (0) target = $region17
    $region16: #{tpu_custom_call.1} parent=1 // pred_region
      %39 = dma.done [#allocation11], 128
    $region17: #{tpu_custom_call.1} parent=1 // pred_fallthru
      _
    %p40 = scmp.eq.s32.totalorder 0, 0
    // Predicated region
    $region18: #{tpu_custom_call.1} parent=1 // pred_check
      %p41 = pneg %p40
    $region19: #{tpu_custom_call.1} parent=1 // pred_check_branch
      %43 = sbr.rel (%p41) target = $region21
    $region20: #{tpu_custom_call.1} parent=1 // pred_region
      %vm44 = vcmask 7168
      %45 = vst.msk [vmem:[#allocation2] sm:$0xff] %vm44, -1e+30
      %46 = vst.msk [vmem:[#allocation3] sm:$0xff] %vm44, -1e+30
      %47 = vst.msk [vmem:[#allocation4] sm:$0xff] %vm44, 0.0
      %48 = vst.msk [vmem:[#allocation5] sm:$0xff] %vm44, 0.0
      %49 = vst.msk [vmem:[#allocation6] sm:$0xff] %vm44, 0.0
    $region21: #{tpu_custom_call.1} parent=1 // pred_fallthru
      _
    %v50 = vld [vmem:[#allocation7] sm:$0xff]
    %v51 = vld [vmem:[#allocation10] sm:$0xff]
    %v52 = vld [vmem:[#allocation2] sm:$0xff]
    %v53 = vld [vmem:[#allocation3] sm:$0xff]
    %vm54 = vcmask 261120
    %v55 = vsel %vm54, %v50, -inf
    %56 = vmax.xlane.f32.xlu0 %v55
    %v57 = vpop.xlane.xlu0 %56
    %v58 = vmax.f32 %v52, %v57
    %v59 = vsel %vm54, %v51, -inf
    %60 = vmax.xlane.f32.xlu0 %v59
    %v61 = vpop.xlane.xlu0 %60
    %v62 = vmax.f32 %v53, %v61
    %64 = vset.pattern.permute.xlu0 0
    %65 = vperm.xlu0 %64, %v58
    %v66 = vpop.permute.xlu0 %65
    %v68 = vsub.f32 %v50, %v66
    %70 = vset.pattern.permute.xlu0 0
    %71 = vperm.xlu0 %70, %v62
    %v72 = vpop.permute.xlu0 %71
    %v74 = vsub.f32 %v51, %v72
    %v75 = vmul.f32 %v68, 1.442695
    %v76 = vpow.pop %v75
    %v77 = vmul.f32 %v74, 1.442695
    %v78 = vpow.pop %v77
    %v79 = vsel %vm54, %v76, 0.0
    %80 = vadd.xlane.f32.xlu0 %v79
    %v81 = vpop.xlane.xlu0 %80
    %v82 = vsel %vm54, %v78, 0.0
    %83 = vadd.xlane.f32.xlu0 %v82
    %v84 = vpop.xlane.xlu0 %83
    %v85 = vsub.f32 %v74, %v68
    %v86 = vmul.f32 %v78, %v85
    %v87 = vsel %vm54, %v86, 0.0
    %88 = vadd.xlane.f32.xlu0 %v87
    %v89 = vpop.xlane.xlu0 %88
    %v90 = vsub.f32 %v52, %v58
    %v91 = vsub.f32 %v53, %v62
    %v92 = vmul.f32 %v91, 1.442695
    %v93 = vpow.pop %v92
    %v94 = vld [vmem:[#allocation6] sm:$0xff]
    %v95 = vsub.f32 %v91, %v90
    %v96 = vld [vmem:[#allocation5] sm:$0xff]
    %v97 = vmul.f32 %v95, %v96
    %v98 = vadd.f32 %v94, %v97
    %v99 = vmul.f32 %v93, %v98
    %v100 = vadd.f32 %v99, %v89
    %vm101 = vcmask 7168
    %102 = vst.msk [vmem:[#allocation6] sm:$0xff] %vm101, %v100
    %v103 = vmul.f32 %v90, 1.442695
    %v104 = vpow.pop %v103
    %v105 = vld [vmem:[#allocation4] sm:$0xff]
    %v106 = vmul.f32 %v104, %v105
    %v107 = vadd.f32 %v106, %v81
    %108 = vst.msk [vmem:[#allocation4] sm:$0xff] %vm101, %v107
    %v109 = vld [vmem:[#allocation5] sm:$0xff]
    %v110 = vmul.f32 %v93, %v109
    %v111 = vadd.f32 %v110, %v84
    %112 = vst.msk [vmem:[#allocation5] sm:$0xff] %vm101, %v111
    %113 = vst.msk [vmem:[#allocation2] sm:$0xff] %vm101, %v58
    %114 = vst.msk [vmem:[#allocation3] sm:$0xff] %vm101, %v62
    // Predicated region
    $region22: #{tpu_custom_call.1} parent=1 // pred_check
      %p115 = pneg %p40
    $region23: #{tpu_custom_call.1} parent=1 // pred_check_branch
      %117 = sbr.rel (%p115) target = $region25
    $region24: #{tpu_custom_call.1} parent=1 // pred_region
      %v118 = vld [vmem:[#allocation5] sm:$0xff]
      %v119 = vrcp.pop %v118
      %v120 = vmul.f32 %v118, %v119
      %v121 = vsub.f32 1.0, %v120
      %v122 = vmul.f32 %v119, %v121
      %v123 = vadd.f32 %v119, %v122
      %vm124 = vweird.f32 %v118
      %vm125 = vweird.f32 %v119
      %vm126 = vmor %vm124, %vm125
      %v127 = vsel %vm126, %v119, %v123
      %v128 = vand.u32 2147483647, %v118
      %vm129 = vcmp.eq.f32.partialorder %v128, 8.507059e+37
      %v130 = vand.u32 %v118, 2147483648
      %v131 = vor.u32 1.1754944e-38, %v130
      %v132 = vsel %vm129, %v131, %v127
      %v133 = vld [vmem:[#allocation6] sm:$0xff]
      %v134 = vmul.f32 %v133, %v132
      %v135 = vld [vmem:[#allocation4] sm:$0xff]
      %v136 = vmul.f32 %v135, %v132
      %v137 = vlog2.pop %v136
      %v138 = vmul.f32 %v137, 0.6931472
      %v139 = vadd.f32 %v134, %v138
      %v140 = vsel %vm101, %v139, 0.0
      %141 = vadd.xlane.f32.xlu0 %v140
      %v142 = vpop.xlane.xlu0 %141
      %v143 = vrot.slane %v142, 4
      %v144 = vadd.f32 %v142, %v143
      %v145 = vrot.slane %v144, 2
      %v146 = vadd.f32 %v144, %v145
      %v147 = vrot.slane %v146, 1
      %v148 = vadd.f32 %v146, %v147
      %s149 = vtos %v148
      %v150 = vstv %s149
      %151 = vst [vmem:[#allocation12] sm:$0xff] %v150
    $region25: #{tpu_custom_call.1} parent=1 // pred_fallthru
      _
    // Predicated region
    $region26: #{tpu_custom_call.1} parent=1 // pred_check
      _
    $region27: #{tpu_custom_call.1} parent=1 // pred_check_branch
      %153 = sbr.rel (0) target = $region29
    $region28: #{tpu_custom_call.1} parent=1 // pred_region
      %155 = vsyncadd [#allocation9], 0
      %s157 = sshll.u32 [#allocation12], 4
      %s158 = int_to_ptr.vmem [resolvable:$true] %s157
      %s159 = sshll.u32 %s2, 4
      %s160 = int_to_ptr.hbm [resolvable:$true] %s159
      %162 = dma.vmem_to_hbm [thread:$0]  %s158, 128, %s160, [#allocation9]
    $region29: #{tpu_custom_call.1} parent=1 // pred_fallthru
      _
    // Predicated region
    $region30: #{tpu_custom_call.1} parent=1 // pred_check
      _
    $region31: #{tpu_custom_call.1} parent=1 // pred_check_branch
      %164 = sbr.rel (0) target = $region33
    $region32: #{tpu_custom_call.1} parent=1 // pred_region
      %166 = dma.done [#allocation9], 128
    $region33: #{tpu_custom_call.1} parent=1 // pred_fallthru
      _
    %167 = vsyncpa [#allocation8], 1
    %168 = vsyncpa [#allocation11], 1
    %169 = vsyncpa [#allocation9], 1

</llo_original>
